<compile_context>
chip_gen: v7x
topology: tpu7x:2x2x1
jax: 0.10.0
libtpu: 0.0.40
codegen_flags: <defaults>
</compile_context>

<pallas_src>
from functools import partial

import jax
import jax.numpy as jnp
from jax import lax
from jax.experimental import pallas as pl
from jax.experimental.pallas import tpu as pltpu

IGNORE_INDEX = -1.0
LANES = 128
CHUNK_GROUPS = 64        # 64 groups * 4 KiB = 256 KiB per input per inner-loop chunk
TARGET_GROUPS = 512      # 512 groups * 4 KiB = 2 MiB per input per grid step


def _sublanes_for(itemsize: int) -> int:
    # One packed vreg worth of sublanes: 8 for 4-byte, 16 for 2-byte, 32 for 1-byte.
    return max(8, 32 // max(1, min(4, itemsize)))


def _masked_mse_kernel(out_ref, tgt_ref, loss_sum_ref, mask_sum_ref,
                       acc_loss_ref, acc_mask_ref, *,
                       ignore_value, chunk_groups, num_chunks):
    t_idx = pl.program_id(1)

    @pl.when(t_idx == 0)
    def _():
        acc_loss_ref[...] = jnp.zeros_like(acc_loss_ref)
        acc_mask_ref[...] = jnp.zeros_like(acc_mask_ref)

    def body(c, carry):
        start = pl.multiple_of(c * chunk_groups, chunk_groups)
        o = out_ref[pl.ds(start, chunk_groups), :, :]       # (chunk, S, 128) native dtype
        t = tgt_ref[pl.ds(start, chunk_groups), :, :]

        keep = t != jnp.asarray(ignore_value, dtype=t.dtype)
        if o.dtype == t.dtype:
            diff = (o - t).astype(jnp.float32)              # subtract in native dtype
        else:
            diff = o.astype(jnp.float32) - t.astype(jnp.float32)

        sq = jnp.where(keep, diff * diff, jnp.float32(0.0))
        m = jnp.where(keep, jnp.float32(1.0), jnp.float32(0.0))

        # Reduce only the leading (non-layout) axis: pure elementwise vreg adds.
        acc_loss_ref[...] += jnp.sum(sq, axis=0)            # (S, 128)
        acc_mask_ref[...] += jnp.sum(m, axis=0)             # (S, 128)
        return carry

    lax.fori_loop(0, num_chunks, body, 0, unroll=True)

    # Cross-lane/sublane reduce + scalar SMEM write only once per core, at the end.
    @pl.when(t_idx == pl.num_programs(1) - 1)
    def _():
        loss_sum_ref[0, 0] = jnp.sum(acc_loss_ref[...])
        mask_sum_ref[0, 0] = jnp.sum(acc_mask_ref[...])


def ignore_index_mse_mean(output, target, ignore_index=IGNORE_INDEX):
    """output, target: arrays of identical shape (e.g. NCHW). Masked-mean MSE."""
    assert output.shape == target.shape
    n = int(output.size)

    out_flat = output.reshape(-1)
    tgt_flat = target.reshape(-1)
    ignore_f = jnp.float32(ignore_index)

    loss_sum = jnp.float32(0.0)
    mask_sum = jnp.float32(0.0)

    o_isz = jnp.dtype(output.dtype).itemsize
    t_isz = jnp.dtype(target.dtype).itemsize
    sublanes = _sublanes_for(max(o_isz, t_isz))

    # ---- bulk: multiple of (groups_per_tile * sublanes * 128), handled by the kernel ----
    total_groups = n // (sublanes * LANES)

    if total_groups == 0:
        groups_per_tile = 0
        chunk_groups = 0
    elif total_groups < CHUNK_GROUPS:
        groups_per_tile = total_groups
        chunk_groups = total_groups
    else:
        groups_per_tile = min(TARGET_GROUPS, (total_groups // CHUNK_GROUPS) * CHUNK_GROUPS)
        chunk_groups = CHUNK_GROUPS

    bulk_elems = 0
    if groups_per_tile > 0:
        num_chunks = groups_per_tile // chunk_groups
        num_tiles = total_groups // groups_per_tile

        # Leading "core" axis: 2 partial sums so v7x can shard across both TCs.
        nc = 2 if num_tiles >= 2 else 1
        tiles_per_core = num_tiles // nc

        bulk_groups = nc * tiles_per_core * groups_per_tile
        bulk_elems = bulk_groups * sublanes * LANES

        out_bulk = out_flat[:bulk_elems].reshape(bulk_groups, sublanes, LANES)
        tgt_bulk = tgt_flat[:bulk_elems].reshape(bulk_groups, sublanes, LANES)

        kernel = partial(_masked_mse_kernel,
                         ignore_value=float(ignore_index),
                         chunk_groups=chunk_groups,
                         num_chunks=num_chunks)
        block = (groups_per_tile, sublanes, LANES)

        def in_map(c, t):
            return (c * tiles_per_core + t, 0, 0)

        in_tile_bytes = groups_per_tile * sublanes * LANES * (o_isz + t_isz)
        vmem_limit_bytes = int(min(48 << 20, 2 * in_tile_bytes + (12 << 20)))

        bytes_accessed = bulk_elems * (o_isz + t_isz) + 4 * nc * 2
        cost = pl.CostEstimate(flops=6 * bulk_elems, transcendentals=0,
                               bytes_accessed=bytes_accessed)

        ls, ms = pl.pallas_call(
            kernel,
            out_shape=(
                jax.ShapeDtypeStruct((nc, 1), jnp.float32),
                jax.ShapeDtypeStruct((nc, 1), jnp.float32),
            ),
            grid_spec=pltpu.PrefetchScalarGridSpec(
                num_scalar_prefetch=0,
                grid=(nc, tiles_per_core),
                in_specs=[
                    pl.BlockSpec(block, in_map),
                    pl.BlockSpec(block, in_map),
                ],
                out_specs=[
                    pl.BlockSpec((1, 1), lambda c, t: (c, 0),
                                 memory_space=pltpu.SMEM),
                    pl.BlockSpec((1, 1), lambda c, t: (c, 0),
                                 memory_space=pltpu.SMEM),
                ],
                scratch_shapes=[
                    pltpu.VMEM((sublanes, LANES), jnp.float32),
                    pltpu.VMEM((sublanes, LANES), jnp.float32),
                ],
            ),
            compiler_params=pltpu.CompilerParams(
                dimension_semantics=("parallel", "arbitrary"),
                vmem_limit_bytes=vmem_limit_bytes),
            cost_estimate=cost,
        )(out_bulk, tgt_bulk)

        loss_sum = loss_sum + jnp.sum(ls)
        mask_sum = mask_sum + jnp.sum(ms)

    # ---- tail: fewer than one tile worth of elements, plain jnp ----
    tail_n = n - bulk_elems
    if tail_n > 0:
        ot = out_flat[bulk_elems:].astype(jnp.float32)
        tt_native = tgt_flat[bulk_elems:]
        keep = (tt_native != jnp.asarray(ignore_index, dtype=tt_native.dtype))
        tt = tt_native.astype(jnp.float32)
        d = ot - tt
        m = jnp.where(keep, jnp.float32(1.0), jnp.float32(0.0))
        loss_sum = loss_sum + jnp.sum(jnp.where(keep, d * d, jnp.float32(0.0)))
        mask_sum = mask_sum + jnp.sum(m)

    eps = jnp.finfo(jnp.float32).eps   # matches torch.finfo(torch.float32).eps
    return loss_sum / (mask_sum + eps)


if __name__ == "__main__":
    key = jax.random.PRNGKey(0)
    k1, k2, k3 = jax.random.split(key, 3)

    B, C, H, W = 2, 4, 16, 16  # NCHW
    output = jax.random.normal(k1, (B, C, H, W), dtype=jnp.float32)
    target = jax.random.normal(k2, (B, C, H, W), dtype=jnp.float32)
    # Sprinkle ignore_index values into the target.
    ignore_mask = jax.random.bernoulli(k3, p=0.25, shape=(B, C, H, W))
    target = jnp.where(ignore_mask, jnp.float32(IGNORE_INDEX), target)

    fn = jax.jit(ignore_index_mse_mean)
    result = fn(output, target)
    result = jax.block_until_ready(result)

    # Pure-JAX reference for correctness check.
    loss_ref = (output - target) ** 2
    mask_ref = jnp.where(target == IGNORE_INDEX, 0.0, 1.0)
    ref = jnp.sum(loss_ref * mask_ref) / (jnp.sum(mask_ref) + jnp.finfo(jnp.float32).eps)

    assert jnp.allclose(result, ref, rtol=1e-5, atol=1e-6), (result, ref)
    print("KERNEL_OK")
</pallas_src>

<mosaic_0001>
module attributes {stable_mosaic.version = 11 : i64} {
  func.func @_masked_mse_kernel(%arg0: i32, %arg1: i32, %arg2: memref<2x8x128xf32, #tpu.memory_space<vmem>>, %arg3: memref<2x8x128xf32, #tpu.memory_space<vmem>>, %arg4: memref<1x1xf32, #tpu.memory_space<smem>>, %arg5: memref<1x1xf32, #tpu.memory_space<smem>>, %arg6: memref<8x128xf32, #tpu.memory_space<vmem>>, %arg7: memref<8x128xf32, #tpu.memory_space<vmem>>) attributes {dimension_semantics = [#tpu.dimension_semantics<parallel>, #tpu.dimension_semantics<arbitrary>], iteration_bounds = array<i64: 1, 1>, scalar_prefetch = 0 : i64, scratch_operands = 2 : i64, tpu.core_type = #tpu.core_type<tc>, window_params = [{transform_indices = @transform_0, window_bounds = array<i64: 2, 8, 128>}, {transform_indices = @transform_1, window_bounds = array<i64: 2, 8, 128>}, {transform_indices = @transform_2, window_bounds = array<i64: 1, 1>}, {transform_indices = @transform_3, window_bounds = array<i64: 1, 1>}]} {
    %c0_i32 = arith.constant 0 : i32
    %0 = arith.cmpi eq, %arg1, %c0_i32 : i32
    %1 = arith.extui %0 : i1 to i32
    %c0_i32_0 = arith.constant 0 : i32
    %2 = arith.cmpi ne, %1, %c0_i32_0 : i32
    scf.if %2 {
      %cst_20 = arith.constant 0.000000e+00 : f32
      %29 = vector.broadcast %cst_20 : f32 to vector<8x128xf32>
      %c0_21 = arith.constant 0 : index
      %c0_22 = arith.constant 0 : index
      %30 = vector.load %arg6[%c0_21, %c0_22] : memref<8x128xf32, #tpu.memory_space<vmem>>, vector<8x128xf32>
      tpu.vector_store %arg6[%c0_21, %c0_22], %29 {strides = array<i32>} : memref<8x128xf32, #tpu.memory_space<vmem>>, vector<8x128xf32>,
      %cst_23 = arith.constant 0.000000e+00 : f32
      %31 = vector.broadcast %cst_23 : f32 to vector<8x128xf32>
      %c0_24 = arith.constant 0 : index
      %c0_25 = arith.constant 0 : index
      %32 = vector.load %arg7[%c0_24, %c0_25] : memref<8x128xf32, #tpu.memory_space<vmem>>, vector<8x128xf32>
      tpu.vector_store %arg7[%c0_24, %c0_25], %31 {strides = array<i32>} : memref<8x128xf32, #tpu.memory_space<vmem>>, vector<8x128xf32>,
    } else {
    }
    %c0_i32_1 = arith.constant 0 : i32
    %c2_i32 = arith.constant 2 : i32
    %3 = arith.muli %c0_i32_1, %c2_i32 : i32
    %4 = tpu.assume_multiple %3, 2 : i32
    %5 = arith.index_cast %4 : i32 to index
    %c0 = arith.constant 0 : index
    %c0_2 = arith.constant 0 : index
    %6 = vector.load %arg2[%5, %c0, %c0_2] : memref<2x8x128xf32, #tpu.memory_space<vmem>>, vector<2x8x128xf32>
    %7 = arith.index_cast %4 : i32 to index
    %c0_3 = arith.constant 0 : index
    %c0_4 = arith.constant 0 : index
    %8 = vector.load %arg3[%7, %c0_3, %c0_4] : memref<2x8x128xf32, #tpu.memory_space<vmem>>, vector<2x8x128xf32>
    %cst = arith.constant -1.000000e+00 : f32
    %9 = vector.broadcast %cst : f32 to vector<2x8x128xf32>
    %10 = arith.cmpf one, %8, %9 : vector<2x8x128xf32>
    %11 = arith.subf %6, %8 : vector<2x8x128xf32>
    %12 = arith.mulf %11, %11 : vector<2x8x128xf32>
    %cst_5 = arith.constant 0.000000e+00 : f32
    %13 = vector.broadcast %cst_5 : f32 to vector<2x8x128xf32>
    %14 = arith.select %10, %12, %13 : vector<2x8x128xi1>, vector<2x8x128xf32>
    %cst_6 = arith.constant 1.000000e+00 : f32
    %cst_7 = arith.constant 0.000000e+00 : f32
    %15 = vector.broadcast %cst_6 : f32 to vector<2x8x128xf32>
    %16 = vector.broadcast %cst_7 : f32 to vector<2x8x128xf32>
    %17 = arith.select %10, %15, %16 : vector<2x8x128xi1>, vector<2x8x128xf32>
    %c0_8 = arith.constant 0 : index
    %c0_9 = arith.constant 0 : index
    %18 = vector.load %arg6[%c0_8, %c0_9] : memref<8x128xf32, #tpu.memory_space<vmem>>, vector<8x128xf32>
    %cst_10 = arith.constant dense<0.000000e+00> : vector<8x128xf32>
    %19 = vector.multi_reduction <add>, %14, %cst_10 [0] : vector<2x8x128xf32> to vector<8x128xf32>
    %20 = arith.addf %18, %19 : vector<8x128xf32>
    %c0_11 = arith.constant 0 : index
    %c0_12 = arith.constant 0 : index
    %21 = vector.load %arg6[%c0_11, %c0_12] : memref<8x128xf32, #tpu.memory_space<vmem>>, vector<8x128xf32>
    tpu.vector_store %arg6[%c0_11, %c0_12], %20 {strides = array<i32>} : memref<8x128xf32, #tpu.memory_space<vmem>>, vector<8x128xf32>,
    %c0_13 = arith.constant 0 : index
    %c0_14 = arith.constant 0 : index
    %22 = vector.load %arg7[%c0_13, %c0_14] : memref<8x128xf32, #tpu.memory_space<vmem>>, vector<8x128xf32>
    %cst_15 = arith.constant dense<0.000000e+00> : vector<8x128xf32>
    %23 = vector.multi_reduction <add>, %17, %cst_15 [0] : vector<2x8x128xf32> to vector<8x128xf32>
    %24 = arith.addf %22, %23 : vector<8x128xf32>
    %c0_16 = arith.constant 0 : index
    %c0_17 = arith.constant 0 : index
    %25 = vector.load %arg7[%c0_16, %c0_17] : memref<8x128xf32, #tpu.memory_space<vmem>>, vector<8x128xf32>
    tpu.vector_store %arg7[%c0_16, %c0_17], %24 {strides = array<i32>} : memref<8x128xf32, #tpu.memory_space<vmem>>, vector<8x128xf32>,
    %c1_i32 = arith.constant 1 : i32
    %c0_i32_18 = arith.constant 0 : i32
    %26 = arith.cmpi eq, %arg1, %c0_i32_18 : i32
    %27 = arith.extui %26 : i1 to i32
    %c0_i32_19 = arith.constant 0 : i32
    %28 = arith.cmpi ne, %27, %c0_i32_19 : i32
    scf.if %28 {
      %c0_20 = arith.constant 0 : index
      %c0_21 = arith.constant 0 : index
      %29 = vector.load %arg6[%c0_20, %c0_21] : memref<8x128xf32, #tpu.memory_space<vmem>>, vector<8x128xf32>
      %30 = vector.shape_cast %29 : vector<8x128xf32> to vector<1x8x128xf32>
      %cst_22 = arith.constant dense<0.000000e+00> : vector<1xf32>
      %31 = vector.multi_reduction <add>, %30, %cst_22 [1, 2] : vector<1x8x128xf32> to vector<1xf32>
      %32 = vector.shape_cast %31 : vector<1xf32> to vector<1x1x1xf32>
      %33 = vector.extract %32[0, 0, 0] : f32 from vector<1x1x1xf32>
      %c0_23 = arith.constant 0 : index
      %c0_24 = arith.constant 0 : index
      %34 = memref.load %arg4[%c0_23, %c0_24] : memref<1x1xf32, #tpu.memory_space<smem>>
      memref.store %33, %arg4[%c0_23, %c0_24] : memref<1x1xf32, #tpu.memory_space<smem>>
      %c0_25 = arith.constant 0 : index
      %c0_26 = arith.constant 0 : index
      %35 = vector.load %arg7[%c0_25, %c0_26] : memref<8x128xf32, #tpu.memory_space<vmem>>, vector<8x128xf32>
      %36 = vector.shape_cast %35 : vector<8x128xf32> to vector<1x8x128xf32>
      %cst_27 = arith.constant dense<0.000000e+00> : vector<1xf32>
      %37 = vector.multi_reduction <add>, %36, %cst_27 [1, 2] : vector<1x8x128xf32> to vector<1xf32>
      %38 = vector.shape_cast %37 : vector<1xf32> to vector<1x1x1xf32>
      %39 = vector.extract %38[0, 0, 0] : f32 from vector<1x1x1xf32>
      %c0_28 = arith.constant 0 : index
      %c0_29 = arith.constant 0 : index
      %40 = memref.load %arg5[%c0_28, %c0_29] : memref<1x1xf32, #tpu.memory_space<smem>>
      memref.store %39, %arg5[%c0_28, %c0_29] : memref<1x1xf32, #tpu.memory_space<smem>>
    } else {
    }
    return
  }
  func.func @transform_0(%arg0: i32, %arg1: i32) -> (i32, i32, i32) {
    %c1_i32 = arith.constant 1 : i32
    %0 = arith.muli %arg0, %c1_i32 : i32
    %1 = arith.addi %0, %arg1 : i32
    %c0_i32 = arith.constant 0 : i32
    %c0_i32_0 = arith.constant 0 : i32
    %c0_i32_1 = arith.constant 0 : i32
    return %1, %c0_i32, %c0_i32_0 : i32, i32, i32
  }
  func.func @transform_1(%arg0: i32, %arg1: i32) -> (i32, i32, i32) {
    %c1_i32 = arith.constant 1 : i32
    %0 = arith.muli %arg0, %c1_i32 : i32
    %1 = arith.addi %0, %arg1 : i32
    %c0_i32 = arith.constant 0 : i32
    %c0_i32_0 = arith.constant 0 : i32
    %c0_i32_1 = arith.constant 0 : i32
    return %1, %c0_i32, %c0_i32_0 : i32, i32, i32
  }
  func.func @transform_2(%arg0: i32, %arg1: i32) -> (i32, i32) {
    %c0_i32 = arith.constant 0 : i32
    %c0_i32_0 = arith.constant 0 : i32
    return %arg0, %c0_i32 : i32, i32
  }
  func.func @transform_3(%arg0: i32, %arg1: i32) -> (i32, i32) {
    %c0_i32 = arith.constant 0 : i32
    %c0_i32_0 = arith.constant 0 : i32
    return %arg0, %c0_i32 : i32, i32
  }
}

</mosaic_0001>

<llo_original>
// kernel: ignore_index_mse_mean.1
$region0: #{ignore_index_mse_mean.1}
  #allocation0 [shape = 'u32[]', space=smem, size = 0x4, offset = 0x4, fixed_abs, tag = 'smem constant byte address 0x4 - core index']
  #allocation1 [shape = 'u32[144,128]{1,0:T(1,128)}', space=vmem, size = 0x12000, scoped, tag = 'internal scratch']
  #allocation2 [shape = 'f32[8,128]{1,0:T(8,128)}', space=vmem, size = 0x1000, scoped, tag = 'scratch operand']
  #allocation3 [shape = 'f32[8,128]{1,0:T(8,128)}', space=vmem, size = 0x1000, scoped, tag = 'scratch operand']
  %s0 = inlined_call_operand.vmem [shape: f32[2,8,128], index: 0, kind: input, shape index: {}]
  %s1 = inlined_call_operand.vmem [shape: f32[2,8,128], index: 1, kind: input, shape index: {}]
  %s2 = inlined_call_operand.hbm [shape: f32[1,1], index: 2, kind: output, shape index: {0}]
  %s3 = inlined_call_operand.hbm [shape: f32[1,1], index: 3, kind: output, shape index: {1}]
  %4 = xla_tuple %s2, %s3
  %s5 = sld [smem:[#allocation0]]
  $region34: #{ignore_index_mse_mean.1} parent=0
    _
  %s7 = ssub.s32 1, %s5
  %s8 = scalar_select 0, %s7, %s5
  $region1: #{ignore_index_mse_mean.1} parent=0
    #allocation4 [shape = 'u8[512]{0}', space=smem, size = 0x200, scoped, tag = 'output window, operand 0, single buffered']
    #allocation5 [shape = 's32[1]{0}', space=sflag, size = 0x4, scoped, tag = 'scoped memory for ignore_index_mse_mean.1']
    #allocation6 [shape = 'u8[512]{0}', space=smem, size = 0x200, scoped, tag = 'output window, operand 1, single buffered']
    #allocation7 [shape = 's32[1]{0}', space=sflag, size = 0x4, scoped, tag = 'scoped memory for ignore_index_mse_mean.1']
    %9 = vsyncpa [#allocation5], 0
    %10 = vsyncpa [#allocation7], 0
    // Predicated region
    $region2: #{ignore_index_mse_mean.1} parent=1 // pred_check
      _
    $region3: #{ignore_index_mse_mean.1} parent=1 // pred_check_branch
      %12 = sbr.rel (0) target = $region5
    $region4: #{ignore_index_mse_mean.1} parent=1 // pred_region
      %s13 = sadd.s32 0, 0
      %s14 = smul.u32 2, %s13
      %p15 = scmp.lt.s32.totalorder %s14, 1
      %s16 = scalar_select %p15, %s14, 1
      %s17 = smul.addr %s16, 8
      %s18 = scalar_lea.vmem %s0, %s17
      %s19 = sadd.s32 0, 0
      %s20 = smul.u32 2, %s19
    $region5: #{ignore_index_mse_mean.1} parent=1 // pred_fallthru
      _
    // Predicated region
    $region6: #{ignore_index_mse_mean.1} parent=1 // pred_check
      _
    $region7: #{ignore_index_mse_mean.1} parent=1 // pred_check_branch
      %22 = sbr.rel (0) target = $region9
    $region8: #{ignore_index_mse_mean.1} parent=1 // pred_region
      %s23 = sadd.s32 0, 0
      %s24 = smul.u32 2, %s23
      %p25 = scmp.lt.s32.totalorder %s24, 1
      %s26 = scalar_select %p25, %s24, 1
      %s27 = smul.addr %s26, 8
      %s28 = scalar_lea.vmem %s1, %s27
      %s29 = sadd.s32 0, 0
      %s30 = smul.u32 2, %s29
    $region9: #{ignore_index_mse_mean.1} parent=1 // pred_fallthru
      _
    %s31 = sadd.s32 0, 0
    %s32 = smul.u32 2, %s31
    %p33 = scmp.lt.s32.totalorder %s32, 1
    %s34 = scalar_select %p33, %s32, 1
    %s35 = smul.addr %s34, 8
    %s36 = scalar_lea.vmem %s0, %s35
    %s37 = sadd.s32 0, 0
    %s38 = smul.u32 2, %s37
    %p39 = scmp.lt.s32.totalorder %s38, 1
    %s40 = scalar_select %p39, %s38, 1
    %s41 = smul.addr %s40, 8
    %s42 = scalar_lea.vmem %s1, %s41
    %s43 = sadd.s32 0, 0
    %s44 = smul.u32 2, %s43
    %p45 = scmp.lt.s32.totalorder %s44, 1
    %s46 = scalar_select %p45, %s44, 1
    %s47 = smul.addr %s46, 8
    %s48 = scalar_lea.vmem %s0, %s47
    %s49 = sadd.s32 0, 0
    %s50 = smul.u32 2, %s49
    %s51 = sadd.s32 0, 0
    %s52 = smul.u32 2, %s51
    %p53 = scmp.lt.s32.totalorder %s52, 1
    %s54 = scalar_select %p53, %s52, 1
    %s55 = smul.addr %s54, 8
    %s56 = scalar_lea.vmem %s1, %s55
    %s57 = sadd.s32 0, 0
    %s58 = smul.u32 2, %s57
    %p59 = scmp.eq.s32.totalorder 0, 0
    // Predicated region
    $region10: #{ignore_index_mse_mean.1} parent=1 // pred_check
      %p60 = pneg %p59
    $region11: #{ignore_index_mse_mean.1} parent=1 // pred_check_branch
      %62 = sbr.rel (%p60) target = $region13
    $region12: #{ignore_index_mse_mean.1} parent=1 // pred_region
      %63 = vst [vmem:[#allocation2] sm:$0xff] 0.0
      %64 = vst [vmem:[#allocation3] sm:$0xff] 0.0
    $region13: #{ignore_index_mse_mean.1} parent=1 // pred_fallthru
      _
    %s65 = smul.u32 0, 8
    %s66 = scalar_lea.vmem %s48, %s65
    %v67 = vld [vmem:[%s66] sm:$0xff]
    %v68 = vld [vmem:[%s66 + $0x8] sm:$0xff]
    %s69 = scalar_lea.vmem %s56, %s65
    %v70 = vld [vmem:[%s69] sm:$0xff]
    %v71 = vld [vmem:[%s69 + $0x8] sm:$0xff]
    %vm72 = vcmp.ne.f32.partialorder %v70, -1.0
    %vm73 = vcmp.ne.f32.partialorder %v71, -1.0
    %v74 = vsub.f32 %v67, %v70
    %v75 = vsub.f32 %v68, %v71
    %v76 = vmul.f32 %v74, %v74
    %v77 = vmul.f32 %v75, %v75
    %v78 = vsel %vm72, %v76, 0.0
    %v79 = vsel %vm73, %v77, 0.0
    %v80 = vsel %vm72, 1.0, 0.0
    %v81 = vsel %vm73, 1.0, 0.0
    %v82 = vld [vmem:[#allocation2] sm:$0xff]
    %v83 = vadd.f32 %v78, %v79
    %v84 = vadd.f32 %v82, %v83
    %85 = vst [vmem:[#allocation2] sm:$0xff] %v84
    %v86 = vld [vmem:[#allocation3] sm:$0xff]
    %v87 = vadd.f32 %v80, %v81
    %v88 = vadd.f32 %v86, %v87
    %89 = vst [vmem:[#allocation3] sm:$0xff] %v88
    // Predicated region
    $region14: #{ignore_index_mse_mean.1} parent=1 // pred_check
      %p90 = pneg %p59
    $region15: #{ignore_index_mse_mean.1} parent=1 // pred_check_branch
      %92 = sbr.rel (%p90) target = $region17
    $region16: #{ignore_index_mse_mean.1} parent=1 // pred_region
      %v93 = vld [vmem:[#allocation2] sm:$0xff]
      %94 = vadd.xlane.f32.xlu0 %v93
      %v95 = vpop.xlane.xlu0 %94
      %v96 = vrot.slane %v95, 4
      %v97 = vadd.f32 %v95, %v96
      %v98 = vrot.slane %v97, 2
      %v99 = vadd.f32 %v97, %v98
      %v100 = vrot.slane %v99, 1
      %v101 = vadd.f32 %v99, %v100
      %s102 = vtos %v101
      %s103 = scalar_lea.smem [#allocation4], 0
      %104 = sst [smem:[%s103]] %s102
      %v105 = vld [vmem:[#allocation3] sm:$0xff]
      %106 = vadd.xlane.f32.xlu0 %v105
      %v107 = vpop.xlane.xlu0 %106
      %v108 = vrot.slane %v107, 4
      %v109 = vadd.f32 %v107, %v108
      %v110 = vrot.slane %v109, 2
      %v111 = vadd.f32 %v109, %v110
      %v112 = vrot.slane %v111, 1
      %v113 = vadd.f32 %v111, %v112
      %s114 = vtos %v113
      %s115 = scalar_lea.smem [#allocation6], 0
      %116 = sst [smem:[%s115]] %s114
    $region17: #{ignore_index_mse_mean.1} parent=1 // pred_fallthru
      _
    // Predicated region
    $region18: #{ignore_index_mse_mean.1} parent=1 // pred_check
      _
    $region19: #{ignore_index_mse_mean.1} parent=1 // pred_check_branch
      %118 = sbr.rel (0) target = $region21
    $region20: #{ignore_index_mse_mean.1} parent=1 // pred_region
      %s120 = ssub.s32 16, 16
      %121 = vsyncadd [#allocation5], %s120
      %124 = dma.smem_to_hbm [#allocation4], 16, %s2, [#allocation5]
    $region21: #{ignore_index_mse_mean.1} parent=1 // pred_fallthru
      _
    // Predicated region
    $region22: #{ignore_index_mse_mean.1} parent=1 // pred_check
      _
    $region23: #{ignore_index_mse_mean.1} parent=1 // pred_check_branch
      %126 = sbr.rel (0) target = $region25
    $region24: #{ignore_index_mse_mean.1} parent=1 // pred_region
      %s128 = ssub.s32 16, 16
      %129 = vsyncadd [#allocation7], %s128
      %132 = dma.smem_to_hbm [#allocation6], 16, %s3, [#allocation7]
    $region25: #{ignore_index_mse_mean.1} parent=1 // pred_fallthru
      _
    // Predicated region
    $region26: #{ignore_index_mse_mean.1} parent=1 // pred_check
      _
    $region27: #{ignore_index_mse_mean.1} parent=1 // pred_check_branch
      %134 = sbr.rel (0) target = $region29
    $region28: #{ignore_index_mse_mean.1} parent=1 // pred_region
      %135 = dma.done [#allocation5], 16
    $region29: #{ignore_index_mse_mean.1} parent=1 // pred_fallthru
      _
    // Predicated region
    $region30: #{ignore_index_mse_mean.1} parent=1 // pred_check
      _
    $region31: #{ignore_index_mse_mean.1} parent=1 // pred_check_branch
      %137 = sbr.rel (0) target = $region33
    $region32: #{ignore_index_mse_mean.1} parent=1 // pred_region
      %138 = dma.done [#allocation7], 16
    $region33: #{ignore_index_mse_mean.1} parent=1 // pred_fallthru
      _
    %139 = sfence
    %140 = vsyncpa [#allocation5], 1
    %141 = vsyncpa [#allocation7], 1

</llo_original>
